<compile_context>
chip_gen: v5e
topology: v5e:2x2
jax: 0.10.0
libtpu: 0.0.40
codegen_flags: <defaults>
</compile_context>

<pallas_src>
import jax
import jax.numpy as jnp
from jax import lax
from jax.experimental import pallas as pl
from jax.experimental.pallas import tpu as pltpu

EPS = 1e-3
EPS2 = EPS * EPS

LANE = 128                      # lane width (fast axis)
SUB_F32 = 8                     # f32 sublanes per vreg
NUM_ACC = 8                     # independent accumulators for the in-tile reduce
MAX_BLOCK_BYTES = 4 << 20       # ~4 MiB per input buffer per pipeline slot
MIN_PALLAS_ELEMS = 1024         # below this a fused XLA reduce beats the kernel launch

_PACK = {4: 8, 2: 16, 1: 32}    # sublane packing by dtype itemsize


def _round_up(a, b):
    return ((a + b - 1) // b) * b


def _make_charbonnier_kernel(block_rows, R, W, H, boundary):
    """One grid step: (block_rows, W) tiles of pred/gt -> (1, 8, W) f32 partial sum."""
    needs_row_mask = (R % block_rows) != 0
    needs_mask = needs_row_mask or (boundary is not None)

    def kernel(pred_ref, gt_ref, out_ref):
        d = pred_ref[...].astype(jnp.float32) - gt_ref[...].astype(jnp.float32)
        v = jnp.sqrt(d * d + jnp.float32(EPS2))

        if needs_mask:
            row_ids = (pl.program_id(0) * block_rows
                       + lax.broadcasted_iota(jnp.int32, (block_rows, W), 0))
            mask = None
            if needs_row_mask:                      # rows past the end of the array
                mask = row_ids < R
            if boundary is not None:                # boundary_ignore: crop via mask
                h = row_ids % H
                col = lax.broadcasted_iota(jnp.int32, (block_rows, W), 1)
                bmask = ((h >= boundary) & (h < H - boundary)
                         & (col >= boundary) & (col < W - boundary))
                mask = bmask if mask is None else (mask & bmask)
            v = jnp.where(mask, v, jnp.float32(0.0))

        # Reduce (block_rows, W) -> (8, W).  For large tiles split into NUM_ACC
        # independent accumulators so the adds don't form one long dependent chain.
        groups = block_rows // SUB_F32
        v3 = v.reshape(groups, SUB_F32, W)
        if groups % NUM_ACC == 0 and groups >= 2 * NUM_ACC:
            partial = (v3.reshape(groups // NUM_ACC, NUM_ACC, SUB_F32, W)
                       .sum(axis=0).sum(axis=0))
        else:
            partial = v3.sum(axis=0)
        out_ref[...] = partial.reshape(1, SUB_F32, W)

    return kernel


def charbonnier_loss(pred, gt, boundary_ignore=None, valid=None):
    """Matches CharbonnierLoss(boundary_ignore).forward(pred, gt): scalar mean loss."""
    del valid  # unused by the reference module
    assert pred.shape == gt.shape, (pred.shape, gt.shape)
    n = pred.size

    # Tiny inputs: kernel launch + per-step overhead dominates; use a fused XLA reduce.
    if n < MIN_PALLAS_ELEMS:
        p, g = pred, gt
        if boundary_ignore is not None:
            b = boundary_ignore
            p = p[..., b:-b, b:-b]
            g = g[..., b:-b, b:-b]
        d = p.astype(jnp.float32) - g.astype(jnp.float32)
        return jnp.mean(jnp.sqrt(d * d + jnp.float32(EPS2)))

    W = pred.shape[-1]
    H = pred.shape[-2] if pred.ndim >= 2 else 1
    if boundary_ignore is not None:
        assert pred.ndim >= 2, "boundary_ignore needs >= 2 trailing spatial dims"

    # Free view: collapse leading dims only (no HBM copy, last dim untouched).
    R = n // W
    p2 = pred.reshape(R, W)
    g2 = gt.reshape(R, W)

    # Denominator = number of elements that survive the (virtual) boundary crop.
    if boundary_ignore is None:
        n_valid = n
    else:
        b = boundary_ignore
        n_valid = (n // (H * W)) * max(H - 2 * b, 0) * max(W - 2 * b, 0)

    itemsize = max(jnp.dtype(pred.dtype).itemsize, jnp.dtype(gt.dtype).itemsize)
    pack = max(_PACK.get(jnp.dtype(pred.dtype).itemsize, 8),
               _PACK.get(jnp.dtype(gt.dtype).itemsize, 8))
    w_pad = _round_up(W, LANE)   # VMEM rows are padded to full 128-lane width

    # Largest tile under the per-buffer byte budget, rounded to the dtype's sublane packing.
    rows_cap = max(pack, (MAX_BLOCK_BYTES // (w_pad * itemsize)) // pack * pack)
    # Guarantee >= 2 chunks when there is enough work so the "parallel" grid axis can be
    # sharded across both v7x TensorCores (harmless on 1-TC v5e/v6e).
    if R >= 2 * pack:
        block_rows = min(rows_cap, _round_up(pl.cdiv(R, 2), pack))
    else:
        block_rows = min(rows_cap, _round_up(R, pack))
    block_rows = max(block_rows, pack)
    num_chunks = pl.cdiv(R, block_rows)

    # Working set: 2 inputs x 2 pipeline buffers + the (tiny) partial-sum output buffers.
    working = 2 * 2 * block_rows * w_pad * itemsize + 2 * SUB_F32 * w_pad * 4
    vmem_limit = int(min(working + (8 << 20), 48 << 20))

    cost = pl.CostEstimate(
        flops=5 * n,                      # sub, mul, add, select, cast
        transcendentals=n,                # sqrt
        bytes_accessed=2 * n * itemsize + num_chunks * SUB_F32 * W * 4,
    )

    partials = pl.pallas_call(
        _make_charbonnier_kernel(block_rows, R, W, H, boundary_ignore),
        out_shape=jax.ShapeDtypeStruct((num_chunks, SUB_F32, W), jnp.float32),
        grid_spec=pltpu.PrefetchScalarGridSpec(
            num_scalar_prefetch=0,
            grid=(num_chunks,),
            in_specs=[
                pl.BlockSpec((block_rows, W), lambda i: (i, 0)),
                pl.BlockSpec((block_rows, W), lambda i: (i, 0)),
            ],
            out_specs=pl.BlockSpec((1, SUB_F32, W), lambda i: (i, 0, 0)),
        ),
        compiler_params=pltpu.CompilerParams(
            dimension_semantics=("parallel",),
            vmem_limit_bytes=vmem_limit,
        ),
        cost_estimate=cost,
    )(p2, g2)

    total = jnp.sum(partials, dtype=jnp.float32)
    return total / jnp.float32(n_valid)


class CharbonnierLoss:
    """Functional equivalent of the PyTorch module."""

    def __init__(self, boundary_ignore=None):
        self.boundary_ignore = boundary_ignore

    def __call__(self, pred, gt, valid=None):
        return charbonnier_loss(pred, gt, self.boundary_ignore, valid)


def _reference(pred, gt, boundary_ignore=None):
    if boundary_ignore is not None:
        b = boundary_ignore
        pred = pred[..., b:-b, b:-b]
        gt = gt[..., b:-b, b:-b]
    d = pred.astype(jnp.float32) - gt.astype(jnp.float32)
    return jnp.mean(jnp.sqrt(d * d + EPS2))


if __name__ == "__main__":
    key = jax.random.PRNGKey(0)
    k1, k2, k3, k4, k5, k6 = jax.random.split(key, 6)

    # Case 1: small NCHW shape, no boundary crop (multi-chunk "parallel" grid path).
    pred = jax.random.normal(k1, (2, 4, 16, 16), dtype=jnp.float32)
    gt = jax.random.normal(k2, (2, 4, 16, 16), dtype=jnp.float32)
    loss = jax.block_until_ready(CharbonnierLoss()(pred, gt))
    ref = _reference(pred, gt)
    assert jnp.allclose(loss, ref, rtol=1e-5, atol=1e-6), (loss, ref)

    # Case 2: boundary_ignore handled entirely in-kernel, plus a ragged last block.
    pred_b = jax.random.normal(k3, (2, 3, 20, 20), dtype=jnp.float32)
    gt_b = jax.random.normal(k4, (2, 3, 20, 20), dtype=jnp.float32)
    loss_b = jax.block_until_ready(CharbonnierLoss(boundary_ignore=2)(pred_b, gt_b))
    ref_b = _reference(pred_b, gt_b, boundary_ignore=2)
    assert jnp.allclose(loss_b, ref_b, rtol=1e-5, atol=1e-6), (loss_b, ref_b)

    # Case 3: lane-dense W=128 tiles, large enough for the split-accumulator reduce path.
    pred_c = jax.random.normal(k5, (2, 4, 64, 128), dtype=jnp.float32)
    gt_c = jax.random.normal(k6, (2, 4, 64, 128), dtype=jnp.float32)
    loss_c = jax.block_until_ready(CharbonnierLoss()(pred_c, gt_c))
    ref_c = _reference(pred_c, gt_c)
    assert jnp.allclose(loss_c, ref_c, rtol=1e-5, atol=1e-6), (loss_c, ref_c)

    print("KERNEL_OK")
</pallas_src>

<mosaic_0001>
module attributes {stable_mosaic.version = 11 : i64} {
  func.func @kernel(%arg0: i32, %arg1: memref<64x16xf32, #tpu.memory_space<vmem>>, %arg2: memref<64x16xf32, #tpu.memory_space<vmem>>, %arg3: memref<1x8x16xf32, #tpu.memory_space<vmem>>) attributes {dimension_semantics = [#tpu.dimension_semantics<parallel>], iteration_bounds = array<i64: 2>, scalar_prefetch = 0 : i64, scratch_operands = 0 : i64, tpu.core_type = #tpu.core_type<tc>, window_params = [{transform_indices = @transform_0, window_bounds = array<i64: 64, 16>}, {transform_indices = @transform_1, window_bounds = array<i64: 64, 16>}, {transform_indices = @transform_2, window_bounds = array<i64: 1, 8, 16>}]} {
    %c0 = arith.constant 0 : index
    %c0_0 = arith.constant 0 : index
    %0 = vector.load %arg1[%c0, %c0_0] : memref<64x16xf32, #tpu.memory_space<vmem>>, vector<64x16xf32>
    %c0_1 = arith.constant 0 : index
    %c0_2 = arith.constant 0 : index
    %1 = vector.load %arg2[%c0_1, %c0_2] : memref<64x16xf32, #tpu.memory_space<vmem>>, vector<64x16xf32>
    %2 = arith.subf %0, %1 : vector<64x16xf32>
    %3 = arith.mulf %2, %2 : vector<64x16xf32>
    %cst = arith.constant 9.99999997E-7 : f32
    %4 = vector.broadcast %cst : f32 to vector<64x16xf32>
    %5 = arith.addf %3, %4 : vector<64x16xf32>
    %6 = math.sqrt %5 : vector<64x16xf32>
    %7 = vector.shape_cast %6 : vector<64x16xf32> to vector<8x8x16xf32>
    %cst_3 = arith.constant dense<0.000000e+00> : vector<8x16xf32>
    %8 = vector.multi_reduction <add>, %7, %cst_3 [0] : vector<8x8x16xf32> to vector<8x16xf32>
    %9 = vector.shape_cast %8 : vector<8x16xf32> to vector<1x8x16xf32>
    %c0_4 = arith.constant 0 : index
    %c0_5 = arith.constant 0 : index
    %c0_6 = arith.constant 0 : index
    %10 = vector.load %arg3[%c0_4, %c0_5, %c0_6] : memref<1x8x16xf32, #tpu.memory_space<vmem>>, vector<1x8x16xf32>
    tpu.vector_store %arg3[%c0_4, %c0_5, %c0_6], %9 {strides = array<i32>} : memref<1x8x16xf32, #tpu.memory_space<vmem>>, vector<1x8x16xf32>,
    return
  }
  func.func @transform_0(%arg0: i32) -> (i32, i32) {
    %c0_i32 = arith.constant 0 : i32
    %c0_i32_0 = arith.constant 0 : i32
    return %arg0, %c0_i32 : i32, i32
  }
  func.func @transform_1(%arg0: i32) -> (i32, i32) {
    %c0_i32 = arith.constant 0 : i32
    %c0_i32_0 = arith.constant 0 : i32
    return %arg0, %c0_i32 : i32, i32
  }
  func.func @transform_2(%arg0: i32) -> (i32, i32, i32) {
    %c0_i32 = arith.constant 0 : i32
    %c0_i32_0 = arith.constant 0 : i32
    %c0_i32_1 = arith.constant 0 : i32
    return %arg0, %c0_i32, %c0_i32_0 : i32, i32, i32
  }
}

</mosaic_0001>

<llo_original>
// kernel: tpu_custom_call.1
$region0: #{tpu_custom_call.1}
  #allocation0 [shape = 'u32[]', space=smem, size = 0x4, offset = 0x4, fixed_abs, tag = 'smem constant byte address 0x4 - core index']
  #allocation1 [shape = 'u32[72,128]{1,0:T(1,128)}', space=vmem, size = 0x9000, scoped, tag = 'internal scratch']
  %s0 = inlined_call_operand.vmem [shape: f32[128,16], index: 0, kind: input, shape index: {}]
  %s1 = inlined_call_operand.vmem [shape: f32[128,16], index: 1, kind: input, shape index: {}]
  %s2 = inlined_call_operand.hbm [shape: f32[2,8,16], index: 2, kind: output, shape index: {}]
  %s3 = sld [smem:[#allocation0]]
  $region41: #{tpu_custom_call.1} parent=0
    _
  %s5 = ssub.s32 1, %s3
  %s6 = scalar_select 0, %s5, %s3
  $region1: #{tpu_custom_call.1} parent=0
    #allocation2 [shape = 'u8[8192]{0}', space=vmem, size = 0x2000, scoped, tag = 'output window, operand 0']
    #allocation3 [shape = 's32[2]{0}', space=sflag, size = 0x8, scoped, tag = 'scoped memory for tpu_custom_call.1']
    %7 = vsyncpa [#allocation3], 0
    %s8 = scalar_lea.sflag [#allocation3], 1
    %9 = vsyncpa %s8, 0
    loop: start=0, step=1, limit=4
    $region2: #{tpu_custom_call.1} parent=1 // loop_pre_header
      _
    $region3: #{tpu_custom_call.1} parent=1 // loop_header
      %s11 = sphi 0, %s15
      %p12 = scmp.ge.s32.totalorder %s11, 4
      %s21 = sphi 0, %s23
      %s24 = sphi 0, %s21
      %s25 = sphi 0, %s24
      %s41 = sphi 0, %s25
      %s47 = sphi 0, %s49
      %s50 = sphi 0, %s47
      %s51 = sphi 0, %s50
      %s67 = sphi 0, %s51
      %s73 = sphi 0, %s75
      %s76 = sphi 0, %s73
      %s77 = sphi 0, %s76
      %s93 = sphi 0, %s77
    $region4: #{tpu_custom_call.1} parent=1 // loop_header_branch
      %14 = sbr.rel (%p12) target = $region8
    $region5: #{tpu_custom_call.1} parent=1 // loop_body
      %s16 = ssub.s32 %s11, 1
      %s17 = ssub.s32 %s11, 2
      %s18 = sadd.s32 %s11, 1
      %s19 = ssub.s32 %s11, %s18
      %p20 = scmp.eq.s32.totalorder %s19, 0
      %s22 = sadd.s32 %s21, 1
      %s23 = scalar_select %p20, %s21, %s22
      %p26 = pneg %p20
      %p27 = scmp.eq.s32.totalorder %s11, 1
      %p28 = por %p26, %p27
      %p29 = scmp.ne.s32.totalorder %s21, %s24
      %p30 = scmp.eq.s32.totalorder %s11, 0
      %p31 = por %p29, %p30
      %p32 = scmp.ne.s32.totalorder %s21, %s24
      %p33 = scmp.eq.s32.totalorder %s16, 1
      %p34 = por %p32, %p33
      %p35 = scmp.ne.s32.totalorder %s24, %s25
      %p36 = scmp.eq.s32.totalorder %s16, 0
      %p37 = por %p35, %p36
      %p38 = scmp.ne.s32.totalorder %s24, %s25
      %p39 = scmp.eq.s32.totalorder %s17, 1
      %p40 = por %p38, %p39
      %p42 = scmp.ne.s32.totalorder %s25, %s41
      %p43 = scmp.eq.s32.totalorder %s17, 0
      %p44 = por %p42, %p43
      %s45 = ssub.s32 %s11, %s18
      %p46 = scmp.eq.s32.totalorder %s45, 0
      %s48 = sadd.s32 %s47, 1
      %s49 = scalar_select %p46, %s47, %s48
      %p52 = pneg %p46
      %p53 = scmp.eq.s32.totalorder %s11, 1
      %p54 = por %p52, %p53
      %p55 = scmp.ne.s32.totalorder %s47, %s50
      %p56 = scmp.eq.s32.totalorder %s11, 0
      %p57 = por %p55, %p56
      %p58 = scmp.ne.s32.totalorder %s47, %s50
      %p59 = scmp.eq.s32.totalorder %s16, 1
      %p60 = por %p58, %p59
      %p61 = scmp.ne.s32.totalorder %s50, %s51
      %p62 = scmp.eq.s32.totalorder %s16, 0
      %p63 = por %p61, %p62
      %p64 = scmp.ne.s32.totalorder %s50, %s51
      %p65 = scmp.eq.s32.totalorder %s17, 1
      %p66 = por %p64, %p65
      %p68 = scmp.ne.s32.totalorder %s51, %s67
      %p69 = scmp.eq.s32.totalorder %s17, 0
      %p70 = por %p68, %p69
      %s71 = ssub.s32 %s11, %s18
      %p72 = scmp.eq.s32.totalorder %s71, 0
      %s74 = sadd.s32 %s73, 1
      %s75 = scalar_select %p72, %s73, %s74
      %p78 = pneg %p72
      %p79 = scmp.eq.s32.totalorder %s11, 1
      %p80 = por %p78, %p79
      %p81 = scmp.ne.s32.totalorder %s73, %s76
      %p82 = scmp.eq.s32.totalorder %s11, 0
      %p83 = por %p81, %p82
      %p84 = scmp.ne.s32.totalorder %s73, %s76
      %p85 = scmp.eq.s32.totalorder %s16, 1
      %p86 = por %p84, %p85
      %p87 = scmp.ne.s32.totalorder %s76, %s77
      %p88 = scmp.eq.s32.totalorder %s16, 0
      %p89 = por %p87, %p88
      %p90 = scmp.ne.s32.totalorder %s76, %s77
      %p91 = scmp.eq.s32.totalorder %s17, 1
      %p92 = por %p90, %p91
      %p94 = scmp.ne.s32.totalorder %s77, %s93
      %p95 = scmp.eq.s32.totalorder %s17, 0
      %p96 = por %p94, %p95
      %p97 = scmp.le.s32.totalorder 1, %s11
      %p98 = scmp.lt.s32.totalorder %s11, 3
      %p99 = pnand %p97, %p98
      %p100 = pneg %p99
      // Predicated region
      $region9: #{tpu_custom_call.1} parent=5 // pred_check
        _
      $region10: #{tpu_custom_call.1} parent=5 // pred_check_branch
        %102 = sbr.rel (%p99) target = $region12
      $region11: #{tpu_custom_call.1} parent=5 // pred_region
        %s103 = ssub.s32 %s11, 1
      $region12: #{tpu_custom_call.1} parent=5 // pred_fallthru
        _
      %p104 = scmp.lt.s32.totalorder %s11, 2
      // Predicated region
      $region13: #{tpu_custom_call.1} parent=5 // pred_check
        %p105 = pneg %p104
      $region14: #{tpu_custom_call.1} parent=5 // pred_check_branch
        %107 = sbr.rel (%p105) target = $region16
      $region15: #{tpu_custom_call.1} parent=5 // pred_region
        // Predicated region
        $region17: #{tpu_custom_call.1} parent=15 // pred_check
          %p108 = pneg %p31
        $region18: #{tpu_custom_call.1} parent=15 // pred_check_branch
          %110 = sbr.rel (%p108) target = $region20
        $region19: #{tpu_custom_call.1} parent=15 // pred_region
          %s111 = smul.u32 8, %s11
          %p112 = scmp.lt.s32.totalorder %s111, 15
          %s113 = scalar_select %p112, %s111, 15
          %s114 = smul.addr %s113, 8
          %s115 = scalar_lea.vmem %s0, %s114
          %s116 = smul.u32 8, %s11
        $region20: #{tpu_custom_call.1} parent=15 // pred_fallthru
          _
        // Predicated region
        $region21: #{tpu_custom_call.1} parent=15 // pred_check
          %p117 = pneg %p57
        $region22: #{tpu_custom_call.1} parent=15 // pred_check_branch
          %119 = sbr.rel (%p117) target = $region24
        $region23: #{tpu_custom_call.1} parent=15 // pred_region
          %s120 = smul.u32 8, %s11
          %p121 = scmp.lt.s32.totalorder %s120, 15
          %s122 = scalar_select %p121, %s120, 15
          %s123 = smul.addr %s122, 8
          %s124 = scalar_lea.vmem %s1, %s123
          %s125 = smul.u32 8, %s11
        $region24: #{tpu_custom_call.1} parent=15 // pred_fallthru
          _
      $region16: #{tpu_custom_call.1} parent=5 // pred_fallthru
        _
      %p126 = scmp.le.s32.totalorder 1, %s11
      %p127 = scmp.lt.s32.totalorder %s11, 3
      %p128 = pnand %p126, %p127
      %p129 = pneg %p128
      // Predicated region
      $region25: #{tpu_custom_call.1} parent=5 // pred_check
        _
      $region26: #{tpu_custom_call.1} parent=5 // pred_check_branch
        %131 = sbr.rel (%p128) target = $region28
      $region27: #{tpu_custom_call.1} parent=5 // pred_region
        %s132 = ssub.s32 %s11, 1
        %s133 = smul.u32 8, %s16
        %p134 = scmp.lt.s32.totalorder %s133, 15
        %s135 = scalar_select %p134, %s133, 15
        %s136 = smul.addr %s135, 8
        %s137 = scalar_lea.vmem %s0, %s136
        %p138 = pneg %p37
        %p139 = pneg %p34
        %s140 = smul.u32 8, %s16
        %p141 = scmp.lt.s32.totalorder %s140, 15
        %s142 = scalar_select %p141, %s140, 15
        %s143 = smul.addr %s142, 8
        %s144 = scalar_lea.vmem %s1, %s143
        %p145 = pneg %p63
        %p146 = pneg %p60
        %p147 = pneg %p89
        %p148 = pneg %p86
        %s149 = sand.u32 %s76, 1
        %s150 = scalar_lea.sflag [#allocation3], %s149
        %s151 = sand.u32 %s76, 1
        %s152 = smul.addr %s151, 8
        %s153 = scalar_lea.vmem [#allocation2], %s152
        %s154 = smul.u32 8, %s16
        %p155 = scmp.lt.s32.totalorder %s154, 15
        %s156 = scalar_select %p155, %s154, 15
        %s157 = smul.addr %s156, 8
        %s158 = scalar_lea.vmem %s0, %s157
        %s159 = smul.u32 8, %s16
        %s160 = smul.u32 8, %s16
        %p161 = scmp.lt.s32.totalorder %s160, 15
        %s162 = scalar_select %p161, %s160, 15
        %s163 = smul.addr %s162, 8
        %s164 = scalar_lea.vmem %s1, %s163
        %s165 = smul.u32 8, %s16
        %v166 = vld [vmem:[%s158] sm:$0xff]
        %v167 = vld [vmem:[%s158 + $0x8] sm:$0xff]
        %v168 = vld [vmem:[%s158 + $0x10] sm:$0xff]
        %v169 = vld [vmem:[%s158 + $0x18] sm:$0xff]
        %v170 = vld [vmem:[%s158 + $0x20] sm:$0xff]
        %v171 = vld [vmem:[%s158 + $0x28] sm:$0xff]
        %v172 = vld [vmem:[%s158 + $0x30] sm:$0xff]
        %v173 = vld [vmem:[%s158 + $0x38] sm:$0xff]
        %v174 = vld [vmem:[%s164] sm:$0xff]
        %v175 = vld [vmem:[%s164 + $0x8] sm:$0xff]
        %v176 = vld [vmem:[%s164 + $0x10] sm:$0xff]
        %v177 = vld [vmem:[%s164 + $0x18] sm:$0xff]
        %v178 = vld [vmem:[%s164 + $0x20] sm:$0xff]
        %v179 = vld [vmem:[%s164 + $0x28] sm:$0xff]
        %v180 = vld [vmem:[%s164 + $0x30] sm:$0xff]
        %v181 = vld [vmem:[%s164 + $0x38] sm:$0xff]
        %v182 = vsub.f32 %v166, %v174
        %v183 = vsub.f32 %v167, %v175
        %v184 = vsub.f32 %v168, %v176
        %v185 = vsub.f32 %v169, %v177
        %v186 = vsub.f32 %v170, %v178
        %v187 = vsub.f32 %v171, %v179
        %v188 = vsub.f32 %v172, %v180
        %v189 = vsub.f32 %v173, %v181
        %v190 = vmul.f32 %v182, %v182
        %v191 = vmul.f32 %v183, %v183
        %v192 = vmul.f32 %v184, %v184
        %v193 = vmul.f32 %v185, %v185
        %v194 = vmul.f32 %v186, %v186
        %v195 = vmul.f32 %v187, %v187
        %v196 = vmul.f32 %v188, %v188
        %v197 = vmul.f32 %v189, %v189
        %v198 = vadd.f32 %v190, 1e-06
        %v199 = vadd.f32 %v191, 1e-06
        %v200 = vadd.f32 %v192, 1e-06
        %v201 = vadd.f32 %v193, 1e-06
        %v202 = vadd.f32 %v194, 1e-06
        %v203 = vadd.f32 %v195, 1e-06
        %v204 = vadd.f32 %v196, 1e-06
        %v205 = vadd.f32 %v197, 1e-06
        %v206 = vrsqrt.pop %v198
        %v207 = vmul.f32 %v206, %v198
        %v208 = vmul.f32 %v207, %v206
        %v209 = vmul.f32 0.5, %v208
        %v210 = vsub.f32 1.5, %v209
        %v211 = vmul.f32 %v206, %v210
        %v212 = vmul.f32 %v198, %v211
        %vm213 = vcmp.eq.f32.partialorder %v198, inf
        %v214 = vsel %vm213, %v198, %v212
        %vm215 = vcmp.eq.f32.partialorder %v198, 0.0
        %v216 = vand.u32 %v198, 2147483648
        %v217 = vsel %vm215, %v216, %v214
        %v218 = vrsqrt.pop %v199
        %v219 = vmul.f32 %v218, %v199
        %v220 = vmul.f32 %v219, %v218
        %v221 = vmul.f32 0.5, %v220
        %v222 = vsub.f32 1.5, %v221
        %v223 = vmul.f32 %v218, %v222
        %v224 = vmul.f32 %v199, %v223
        %vm225 = vcmp.eq.f32.partialorder %v199, inf
        %v226 = vsel %vm225, %v199, %v224
        %vm227 = vcmp.eq.f32.partialorder %v199, 0.0
        %v228 = vand.u32 %v199, 2147483648
        %v229 = vsel %vm227, %v228, %v226
        %v230 = vrsqrt.pop %v200
        %v231 = vmul.f32 %v230, %v200
        %v232 = vmul.f32 %v231, %v230
        %v233 = vmul.f32 0.5, %v232
        %v234 = vsub.f32 1.5, %v233
        %v235 = vmul.f32 %v230, %v234
        %v236 = vmul.f32 %v200, %v235
        %vm237 = vcmp.eq.f32.partialorder %v200, inf
        %v238 = vsel %vm237, %v200, %v236
        %vm239 = vcmp.eq.f32.partialorder %v200, 0.0
        %v240 = vand.u32 %v200, 2147483648
        %v241 = vsel %vm239, %v240, %v238
        %v242 = vrsqrt.pop %v201
        %v243 = vmul.f32 %v242, %v201
        %v244 = vmul.f32 %v243, %v242
        %v245 = vmul.f32 0.5, %v244
        %v246 = vsub.f32 1.5, %v245
        %v247 = vmul.f32 %v242, %v246
        %v248 = vmul.f32 %v201, %v247
        %vm249 = vcmp.eq.f32.partialorder %v201, inf
        %v250 = vsel %vm249, %v201, %v248
        %vm251 = vcmp.eq.f32.partialorder %v201, 0.0
        %v252 = vand.u32 %v201, 2147483648
        %v253 = vsel %vm251, %v252, %v250
        %v254 = vrsqrt.pop %v202
        %v255 = vmul.f32 %v254, %v202
        %v256 = vmul.f32 %v255, %v254
        %v257 = vmul.f32 0.5, %v256
        %v258 = vsub.f32 1.5, %v257
        %v259 = vmul.f32 %v254, %v258
        %v260 = vmul.f32 %v202, %v259
        %vm261 = vcmp.eq.f32.partialorder %v202, inf
        %v262 = vsel %vm261, %v202, %v260
        %vm263 = vcmp.eq.f32.partialorder %v202, 0.0
        %v264 = vand.u32 %v202, 2147483648
        %v265 = vsel %vm263, %v264, %v262
        %v266 = vrsqrt.pop %v203
        %v267 = vmul.f32 %v266, %v203
        %v268 = vmul.f32 %v267, %v266
        %v269 = vmul.f32 0.5, %v268
        %v270 = vsub.f32 1.5, %v269
        %v271 = vmul.f32 %v266, %v270
        %v272 = vmul.f32 %v203, %v271
        %vm273 = vcmp.eq.f32.partialorder %v203, inf
        %v274 = vsel %vm273, %v203, %v272
        %vm275 = vcmp.eq.f32.partialorder %v203, 0.0
        %v276 = vand.u32 %v203, 2147483648
        %v277 = vsel %vm275, %v276, %v274
        %v278 = vrsqrt.pop %v204
        %v279 = vmul.f32 %v278, %v204
        %v280 = vmul.f32 %v279, %v278
        %v281 = vmul.f32 0.5, %v280
        %v282 = vsub.f32 1.5, %v281
        %v283 = vmul.f32 %v278, %v282
        %v284 = vmul.f32 %v204, %v283
        %vm285 = vcmp.eq.f32.partialorder %v204, inf
        %v286 = vsel %vm285, %v204, %v284
        %vm287 = vcmp.eq.f32.partialorder %v204, 0.0
        %v288 = vand.u32 %v204, 2147483648
        %v289 = vsel %vm287, %v288, %v286
        %v290 = vrsqrt.pop %v205
        %v291 = vmul.f32 %v290, %v205
        %v292 = vmul.f32 %v291, %v290
        %v293 = vmul.f32 0.5, %v292
        %v294 = vsub.f32 1.5, %v293
        %v295 = vmul.f32 %v290, %v294
        %v296 = vmul.f32 %v205, %v295
        %vm297 = vcmp.eq.f32.partialorder %v205, inf
        %v298 = vsel %vm297, %v205, %v296
        %vm299 = vcmp.eq.f32.partialorder %v205, 0.0
        %v300 = vand.u32 %v205, 2147483648
        %v301 = vsel %vm299, %v300, %v298
        %vm302 = vcmask 130048
        %v303 = vsel %vm302, %v217, 0.0
        %v304 = vsel %vm302, %v229, 0.0
        %v305 = vadd.f32 %v303, %v304
        %v306 = vsel %vm302, %v241, 0.0
        %v307 = vadd.f32 %v305, %v306
        %v308 = vsel %vm302, %v253, 0.0
        %v309 = vadd.f32 %v307, %v308
        %v310 = vsel %vm302, %v265, 0.0
        %v311 = vadd.f32 %v309, %v310
        %v312 = vsel %vm302, %v277, 0.0
        %v313 = vadd.f32 %v311, %v312
        %v314 = vsel %vm302, %v289, 0.0
        %v315 = vadd.f32 %v313, %v314
        %v316 = vsel %vm302, %v301, 0.0
        %v317 = vadd.f32 %v315, %v316
        %318 = vst.msk [vmem:[%s153] sm:$0xff] %vm302, %v317
        %s319 = sand.u32 %s76, 1
        %s320 = scalar_lea.sflag [#allocation3], %s319
        %s321 = sand.u32 %s76, 1
        %s322 = smul.addr %s321, 8
        %s323 = scalar_lea.vmem [#allocation2], %s322
        // Predicated region
        $region29: #{tpu_custom_call.1} parent=27 // pred_check
          %p324 = pneg %p86
        $region30: #{tpu_custom_call.1} parent=27 // pred_check_branch
          %326 = sbr.rel (%p324) target = $region32
        $region31: #{tpu_custom_call.1} parent=27 // pred_region
          %328 = vsyncadd %s320, 0
          %s329 = smul.addr %s16, 8
          %s330 = scalar_lea.hbm %s2, %s329
          %s332 = sshll.u32 %s323, 4
          %s333 = int_to_ptr.vmem [resolvable:$true] %s332
          %s334 = sshll.u32 %s330, 4
          %s335 = int_to_ptr.hbm [resolvable:$true] %s334
          %337 = dma.vmem_to_hbm [thread:$0]  %s333, 128, %s335, %s320
        $region32: #{tpu_custom_call.1} parent=27 // pred_fallthru
          _
      $region28: #{tpu_custom_call.1} parent=5 // pred_fallthru
        _
      %p338 = scmp.le.s32.totalorder 2, %s11
      // Predicated region
      $region33: #{tpu_custom_call.1} parent=5 // pred_check
        %p339 = pneg %p338
      $region34: #{tpu_custom_call.1} parent=5 // pred_check_branch
        %341 = sbr.rel (%p339) target = $region36
      $region35: #{tpu_custom_call.1} parent=5 // pred_region
        %s342 = ssub.s32 %s11, 2
        // Predicated region
        $region37: #{tpu_custom_call.1} parent=35 // pred_check
          %p343 = pneg %p92
        $region38: #{tpu_custom_call.1} parent=35 // pred_check_branch
          %345 = sbr.rel (%p343) target = $region40
        $region39: #{tpu_custom_call.1} parent=35 // pred_region
          %s346 = sand.u32 %s77, 1
          %s347 = scalar_lea.sflag [#allocation3], %s346
          %s348 = sand.u32 %s77, 1
          %s349 = smul.addr %s348, 8
          %s350 = scalar_lea.vmem [#allocation2], %s349
          %352 = dma.done %s347, 128
        $region40: #{tpu_custom_call.1} parent=35 // pred_fallthru
          _
      $region36: #{tpu_custom_call.1} parent=5 // pred_fallthru
        _
    $region6: #{tpu_custom_call.1} parent=1 // loop_footer
      %s15 = sadd.s32 1, %s11
    $region7: #{tpu_custom_call.1} parent=1 // loop_footer_branch
      %10 = sbr.rel target = $region3
    $region8: #{tpu_custom_call.1} parent=1 // loop_exit
      _
    %353 = vsyncpa [#allocation3], 1
    %s354 = scalar_lea.sflag [#allocation3], 1
    %355 = vsyncpa %s354, 1

</llo_original>
